<compile_context>
chip_gen: v6e
topology: v6e:2x2x1
jax: 0.10.0
libtpu: 0.0.40
codegen_flags: <defaults>
</compile_context>

<pallas_src>
import jax
import jax.numpy as jnp
from jax import lax
from jax.experimental import pallas as pl
from jax.experimental.pallas import tpu as pltpu


# ---------------------------------------------------------------- kernel ----

def resblock_kernel(x_ref,
                    w1m_ref, w1c_ref, w1p_ref, b1_ref,
                    w2m_ref, w2c_ref, w2p_ref, b2_ref,
                    w3_ref, b3_ref,
                    o_ref):
    _, C, L = x_ref.shape
    mm_dtype = w1c_ref.dtype                      # matmul operand dtype (bf16 by default)

    # (1, L) boundary masks for the zero-padded +-1 shifts; broadcast inside jnp.where.
    l_idx = lax.broadcasted_iota(jnp.int32, (1, L), 1)
    is_first = l_idx == 0
    is_last = l_idx == (L - 1)

    def conv3(h_f32, w_m1, w_c, w_p1, b_col):
        # h_f32: (C, L) f32 -> pre-activation (C, L) f32 of a k=3 "same" conv,
        # as three accumulated per-tap MXU matmuls (no (3C, L) operand materialized).
        # Shift + mask in f32; cast to the MXU dtype once, right at each matmul.
        h_m1 = jnp.where(is_first, 0.0, pltpu.roll(h_f32, 1, axis=1))      # h[:, l-1]
        h_p1 = jnp.where(is_last, 0.0, pltpu.roll(h_f32, L - 1, axis=1))   # h[:, l+1]
        y = jnp.dot(w_c[...], h_f32.astype(mm_dtype),
                    preferred_element_type=jnp.float32)
        y = y + jnp.dot(w_m1[...], h_m1.astype(mm_dtype),
                        preferred_element_type=jnp.float32)
        y = y + jnp.dot(w_p1[...], h_p1.astype(mm_dtype),
                        preferred_element_type=jnp.float32)
        return y + b_col[...]

    x0 = x_ref[0]
    if x0.dtype != jnp.float32:
        x0 = x0.astype(jnp.float32)

    h = jnp.maximum(conv3(x0, w1m_ref, w1c_ref, w1p_ref, b1_ref), 0.0)     # conv3 + ReLU
    h = jnp.maximum(conv3(h, w2m_ref, w2c_ref, w2p_ref, b2_ref), 0.0)      # conv3 + ReLU
    y = jnp.dot(w3_ref[...], h.astype(mm_dtype),
                preferred_element_type=jnp.float32) + b3_ref[...]          # 1x1 conv

    # Residual: re-read the (already VMEM-resident) input block instead of carrying a
    # f32 copy live across both convs.
    xr = x_ref[0]
    if xr.dtype != jnp.float32:
        xr = xr.astype(jnp.float32)
    o_ref[0] = (y + xr).astype(o_ref.dtype)


# --------------------------------------------------------------- wrapper ----

def _default_vmem_limit_bytes():
    # Scoped VMEM: most of the chip budget, with headroom for compiler scratch.
    # v5e/v6e (128 MiB physical) -> ~100 MiB; v7x (64 MiB) -> ~48 MiB.
    try:
        cap = int(pltpu.get_tpu_info().vmem_capacity_bytes)
    except Exception:
        cap = 128 * 1024 * 1024
    return max(32 * 1024 * 1024, min(cap - 16 * 1024 * 1024, 100 * 1024 * 1024))


def resblock_pallas(x_ncl, params, *, matmul_dtype=jnp.bfloat16, vmem_limit_bytes=None):
    """x_ncl: (B, C, L) float32; params: PyTorch-shaped Conv1d weights/biases."""
    B, C, L = x_ncl.shape
    w1, b1, w2, b2, w3, b3 = params

    # PyTorch Conv1d weight (Cout, Cin, 3) -> three (Cout, Cin) tap matrices.
    # Tap k=0 multiplies x_{l-1}, k=1 multiplies x_l, k=2 multiplies x_{l+1}.
    def taps(w):
        return (w[:, :, 0].astype(matmul_dtype),
                w[:, :, 1].astype(matmul_dtype),
                w[:, :, 2].astype(matmul_dtype))

    w1m, w1c, w1p = taps(w1)
    w2m, w2c, w2p = taps(w2)
    w3f = w3[:, :, 0].astype(matmul_dtype)              # (C, C) 1x1 conv
    b1c = b1.reshape(C, 1).astype(jnp.float32)
    b2c = b2.reshape(C, 1).astype(jnp.float32)
    b3c = b3.reshape(C, 1).astype(jnp.float32)

    if vmem_limit_bytes is None:
        vmem_limit_bytes = _default_vmem_limit_bytes()

    def wspec():      # weight tap: constant index map (fetched once, block == full array)
        return pl.BlockSpec((C, C), lambda b: (0, 0))

    def bspec():      # bias column
        return pl.BlockSpec((C, 1), lambda b: (0, 0))

    out = pl.pallas_call(
        resblock_kernel,
        out_shape=jax.ShapeDtypeStruct((B, C, L), x_ncl.dtype),
        grid=(B,),                                       # batch grid axis, block size 1
        in_specs=[
            pl.BlockSpec((1, C, L), lambda b: (b, 0, 0)),   # activations (NCL block)
            wspec(), wspec(), wspec(), bspec(),             # conv1 taps + bias
            wspec(), wspec(), wspec(), bspec(),             # conv2 taps + bias
            wspec(), bspec(),                                # conv3 (1x1) + bias
        ],
        out_specs=pl.BlockSpec((1, C, L), lambda b: (b, 0, 0)),
        compiler_params=pltpu.CompilerParams(
            dimension_semantics=("parallel",),              # >=2 steps -> both v7x TCs busy
            vmem_limit_bytes=vmem_limit_bytes,
        ),
    )(x_ncl, w1m, w1c, w1p, b1c, w2m, w2c, w2p, b2c, w3f, b3c)
    return out


# ------------------------------------------------------------- reference ----

def resblock_ref(x, params, matmul_dtype=jnp.float32):
    """Pure-JAX mirror of the PyTorch ResBlock (ReLU). `matmul_dtype` sets the conv
    operand precision so the kernel's bf16-MXU numerics can be checked tightly."""
    w1, b1, w2, b2, w3, b3 = params

    def conv(inp, w, b, pad):
        y = lax.conv_general_dilated(
            inp.astype(matmul_dtype), w.astype(matmul_dtype),
            window_strides=(1,), padding=[(pad, pad)],
            dimension_numbers=('NCH', 'OIH', 'NCH'),
            preferred_element_type=jnp.float32)
        return y + b[None, :, None].astype(jnp.float32)

    h = jax.nn.relu(conv(x, w1, b1, 1))
    h = jax.nn.relu(conv(h, w2, b2, 1))
    y = conv(h, w3, b3, 0)
    return y + x.astype(jnp.float32)


# ------------------------------------------------------------------ main ----

if __name__ == "__main__":
    B, C, L = 2, 16, 32
    key = jax.random.PRNGKey(0)
    ks = jax.random.split(key, 7)

    x = jax.random.normal(ks[0], (B, C, L), jnp.float32)
    # Deterministic synthetic parameters (PyTorch Conv1d shapes).
    w1 = 0.2 * jax.random.normal(ks[1], (C, C, 3), jnp.float32)
    b1 = 0.1 * jax.random.normal(ks[2], (C,), jnp.float32)
    w2 = 0.2 * jax.random.normal(ks[3], (C, C, 3), jnp.float32)
    b2 = 0.1 * jax.random.normal(ks[4], (C,), jnp.float32)
    w3 = 0.2 * jax.random.normal(ks[5], (C, C, 1), jnp.float32)
    b3 = 0.1 * jax.random.normal(ks[6], (C,), jnp.float32)
    params = (w1, b1, w2, b2, w3, b3)

    out = resblock_pallas(x, params)          # bf16 MXU operands, f32 everywhere else
    jax.block_until_ready(out)
    assert out.shape == (B, C, L)

    # Structural check: reference with the same bf16 conv operands -> tight match.
    ref_bf16 = resblock_ref(x, params, matmul_dtype=jnp.bfloat16)
    err_bf16 = float(jnp.max(jnp.abs(out - ref_bf16)))
    assert jnp.allclose(out, ref_bf16, atol=2e-2, rtol=2e-2), \
        f"structural max err = {err_bf16}"

    # Sanity check vs the full-f32 PyTorch-equivalent reference; the gap is only the
    # bf16 MXU-operand rounding.
    ref_f32 = resblock_ref(x, params, matmul_dtype=jnp.float32)
    err_f32 = float(jnp.max(jnp.abs(out - ref_f32)))
    assert jnp.allclose(out, ref_f32, atol=0.15, rtol=0.1), \
        f"f32-reference max err = {err_f32}"

    print("KERNEL_OK")
</pallas_src>

<mosaic_0001>
module attributes {stable_mosaic.version = 11 : i64} {
  func.func @resblock_kernel(%arg0: i32, %arg1: memref<1x16x32xf32, #tpu.memory_space<vmem>>, %arg2: memref<16x16xbf16, #tpu.memory_space<vmem>>, %arg3: memref<16x16xbf16, #tpu.memory_space<vmem>>, %arg4: memref<16x16xbf16, #tpu.memory_space<vmem>>, %arg5: memref<16x1xf32, #tpu.memory_space<vmem>>, %arg6: memref<16x16xbf16, #tpu.memory_space<vmem>>, %arg7: memref<16x16xbf16, #tpu.memory_space<vmem>>, %arg8: memref<16x16xbf16, #tpu.memory_space<vmem>>, %arg9: memref<16x1xf32, #tpu.memory_space<vmem>>, %arg10: memref<16x16xbf16, #tpu.memory_space<vmem>>, %arg11: memref<16x1xf32, #tpu.memory_space<vmem>>, %arg12: memref<1x16x32xf32, #tpu.memory_space<vmem>>) attributes {dimension_semantics = [#tpu.dimension_semantics<parallel>], iteration_bounds = array<i64: 2>, scalar_prefetch = 0 : i64, scratch_operands = 0 : i64, tpu.core_type = #tpu.core_type<tc>, window_params = [{transform_indices = @transform_0, window_bounds = array<i64: 1, 16, 32>}, {pipeline_mode = #tpu.pipeline_mode<synchronous>, transform_indices = @transform_1, window_bounds = array<i64: 16, 16>}, {pipeline_mode = #tpu.pipeline_mode<synchronous>, transform_indices = @transform_2, window_bounds = array<i64: 16, 16>}, {pipeline_mode = #tpu.pipeline_mode<synchronous>, transform_indices = @transform_3, window_bounds = array<i64: 16, 16>}, {pipeline_mode = #tpu.pipeline_mode<synchronous>, transform_indices = @transform_4, window_bounds = array<i64: 16, 1>}, {pipeline_mode = #tpu.pipeline_mode<synchronous>, transform_indices = @transform_5, window_bounds = array<i64: 16, 16>}, {pipeline_mode = #tpu.pipeline_mode<synchronous>, transform_indices = @transform_6, window_bounds = array<i64: 16, 16>}, {pipeline_mode = #tpu.pipeline_mode<synchronous>, transform_indices = @transform_7, window_bounds = array<i64: 16, 16>}, {pipeline_mode = #tpu.pipeline_mode<synchronous>, transform_indices = @transform_8, window_bounds = array<i64: 16, 1>}, {pipeline_mode = #tpu.pipeline_mode<synchronous>, transform_indices = @transform_9, window_bounds = array<i64: 16, 16>}, {pipeline_mode = #tpu.pipeline_mode<synchronous>, transform_indices = @transform_10, window_bounds = array<i64: 16, 1>}, {transform_indices = @transform_11, window_bounds = array<i64: 1, 16, 32>}]} {
    %0 = tpu.iota {dimensions = array<i32: 1>} : vector<1x32xi32>
    %c0_i32 = arith.constant 0 : i32
    %1 = vector.broadcast %c0_i32 : i32 to vector<1x32xi32>
    %2 = arith.cmpi eq, %0, %1 : vector<1x32xi32>
    %c31_i32 = arith.constant 31 : i32
    %3 = vector.broadcast %c31_i32 : i32 to vector<1x32xi32>
    %4 = arith.cmpi eq, %0, %3 : vector<1x32xi32>
    %c0 = arith.constant 0 : index
    %c0_0 = arith.constant 0 : index
    %c0_1 = arith.constant 0 : index
    %5 = vector.load %arg1[%c0, %c0_0, %c0_1] : memref<1x16x32xf32, #tpu.memory_space<vmem>>, vector<1x16x32xf32>
    %6 = vector.shape_cast %5 : vector<1x16x32xf32> to vector<16x32xf32>
    %c1_i32 = arith.constant 1 : i32
    %7 = tpu.dynamic_rotate %6 by %c1_i32 dim 1 : vector<16x32xf32>, i32 -> vector<16x32xf32>
    %cst = arith.constant 0.000000e+00 : f32
    %8 = vector.shape_cast %2 : vector<1x32xi1> to vector<1x32xi1>
    %9 = vector.broadcast %8 : vector<1x32xi1> to vector<16x32xi1>
    %10 = vector.broadcast %cst : f32 to vector<16x32xf32>
    %11 = arith.select %9, %10, %7 : vector<16x32xi1>, vector<16x32xf32>
    %c31_i32_2 = arith.constant 31 : i32
    %12 = tpu.dynamic_rotate %6 by %c31_i32_2 dim 1 : vector<16x32xf32>, i32 -> vector<16x32xf32>
    %cst_3 = arith.constant 0.000000e+00 : f32
    %13 = vector.shape_cast %4 : vector<1x32xi1> to vector<1x32xi1>
    %14 = vector.broadcast %13 : vector<1x32xi1> to vector<16x32xi1>
    %15 = vector.broadcast %cst_3 : f32 to vector<16x32xf32>
    %16 = arith.select %14, %15, %12 : vector<16x32xi1>, vector<16x32xf32>
    %c0_4 = arith.constant 0 : index
    %c0_5 = arith.constant 0 : index
    %17 = vector.load %arg3[%c0_4, %c0_5] : memref<16x16xbf16, #tpu.memory_space<vmem>>, vector<16x16xbf16>
    %18 = arith.truncf %6 : vector<16x32xf32> to vector<16x32xbf16>
    %cst_6 = arith.constant dense<0.000000e+00> : vector<16x32xf32>
    %19 = tpu.matmul %17, %18, %cst_6 {dimension_numbers = #tpu.dot_dimension_numbers<[1], [0], [0], [1], [0, 0, 1, 1], [], []>} : vector<16x16xbf16>, vector<16x32xbf16>, vector<16x32xf32> -> vector<16x32xf32>
    %c0_7 = arith.constant 0 : index
    %c0_8 = arith.constant 0 : index
    %20 = vector.load %arg2[%c0_7, %c0_8] : memref<16x16xbf16, #tpu.memory_space<vmem>>, vector<16x16xbf16>
    %21 = arith.truncf %11 : vector<16x32xf32> to vector<16x32xbf16>
    %cst_9 = arith.constant dense<0.000000e+00> : vector<16x32xf32>
    %22 = tpu.matmul %20, %21, %cst_9 {dimension_numbers = #tpu.dot_dimension_numbers<[1], [0], [0], [1], [0, 0, 1, 1], [], []>} : vector<16x16xbf16>, vector<16x32xbf16>, vector<16x32xf32> -> vector<16x32xf32>
    %23 = arith.addf %19, %22 : vector<16x32xf32>
    %c0_10 = arith.constant 0 : index
    %c0_11 = arith.constant 0 : index
    %24 = vector.load %arg4[%c0_10, %c0_11] : memref<16x16xbf16, #tpu.memory_space<vmem>>, vector<16x16xbf16>
    %25 = arith.truncf %16 : vector<16x32xf32> to vector<16x32xbf16>
    %cst_12 = arith.constant dense<0.000000e+00> : vector<16x32xf32>
    %26 = tpu.matmul %24, %25, %cst_12 {dimension_numbers = #tpu.dot_dimension_numbers<[1], [0], [0], [1], [0, 0, 1, 1], [], []>} : vector<16x16xbf16>, vector<16x32xbf16>, vector<16x32xf32> -> vector<16x32xf32>
    %27 = arith.addf %23, %26 : vector<16x32xf32>
    %c0_13 = arith.constant 0 : index
    %c0_14 = arith.constant 0 : index
    %28 = vector.load %arg5[%c0_13, %c0_14] : memref<16x1xf32, #tpu.memory_space<vmem>>, vector<16x1xf32>
    %29 = vector.broadcast %28 : vector<16x1xf32> to vector<16x32xf32>
    %30 = arith.addf %27, %29 : vector<16x32xf32>
    %cst_15 = arith.constant 0.000000e+00 : f32
    %31 = vector.broadcast %cst_15 : f32 to vector<16x32xf32>
    %32 = arith.maximumf %30, %31 : vector<16x32xf32>
    %c1_i32_16 = arith.constant 1 : i32
    %33 = tpu.dynamic_rotate %32 by %c1_i32_16 dim 1 : vector<16x32xf32>, i32 -> vector<16x32xf32>
    %cst_17 = arith.constant 0.000000e+00 : f32
    %34 = vector.shape_cast %2 : vector<1x32xi1> to vector<1x32xi1>
    %35 = vector.broadcast %34 : vector<1x32xi1> to vector<16x32xi1>
    %36 = vector.broadcast %cst_17 : f32 to vector<16x32xf32>
    %37 = arith.select %35, %36, %33 : vector<16x32xi1>, vector<16x32xf32>
    %c31_i32_18 = arith.constant 31 : i32
    %38 = tpu.dynamic_rotate %32 by %c31_i32_18 dim 1 : vector<16x32xf32>, i32 -> vector<16x32xf32>
    %cst_19 = arith.constant 0.000000e+00 : f32
    %39 = vector.shape_cast %4 : vector<1x32xi1> to vector<1x32xi1>
    %40 = vector.broadcast %39 : vector<1x32xi1> to vector<16x32xi1>
    %41 = vector.broadcast %cst_19 : f32 to vector<16x32xf32>
    %42 = arith.select %40, %41, %38 : vector<16x32xi1>, vector<16x32xf32>
    %c0_20 = arith.constant 0 : index
    %c0_21 = arith.constant 0 : index
    %43 = vector.load %arg7[%c0_20, %c0_21] : memref<16x16xbf16, #tpu.memory_space<vmem>>, vector<16x16xbf16>
    %44 = arith.truncf %32 : vector<16x32xf32> to vector<16x32xbf16>
    %cst_22 = arith.constant dense<0.000000e+00> : vector<16x32xf32>
    %45 = tpu.matmul %43, %44, %cst_22 {dimension_numbers = #tpu.dot_dimension_numbers<[1], [0], [0], [1], [0, 0, 1, 1], [], []>} : vector<16x16xbf16>, vector<16x32xbf16>, vector<16x32xf32> -> vector<16x32xf32>
    %c0_23 = arith.constant 0 : index
    %c0_24 = arith.constant 0 : index
    %46 = vector.load %arg6[%c0_23, %c0_24] : memref<16x16xbf16, #tpu.memory_space<vmem>>, vector<16x16xbf16>
    %47 = arith.truncf %37 : vector<16x32xf32> to vector<16x32xbf16>
    %cst_25 = arith.constant dense<0.000000e+00> : vector<16x32xf32>
    %48 = tpu.matmul %46, %47, %cst_25 {dimension_numbers = #tpu.dot_dimension_numbers<[1], [0], [0], [1], [0, 0, 1, 1], [], []>} : vector<16x16xbf16>, vector<16x32xbf16>, vector<16x32xf32> -> vector<16x32xf32>
    %49 = arith.addf %45, %48 : vector<16x32xf32>
    %c0_26 = arith.constant 0 : index
    %c0_27 = arith.constant 0 : index
    %50 = vector.load %arg8[%c0_26, %c0_27] : memref<16x16xbf16, #tpu.memory_space<vmem>>, vector<16x16xbf16>
    %51 = arith.truncf %42 : vector<16x32xf32> to vector<16x32xbf16>
    %cst_28 = arith.constant dense<0.000000e+00> : vector<16x32xf32>
    %52 = tpu.matmul %50, %51, %cst_28 {dimension_numbers = #tpu.dot_dimension_numbers<[1], [0], [0], [1], [0, 0, 1, 1], [], []>} : vector<16x16xbf16>, vector<16x32xbf16>, vector<16x32xf32> -> vector<16x32xf32>
    %53 = arith.addf %49, %52 : vector<16x32xf32>
    %c0_29 = arith.constant 0 : index
    %c0_30 = arith.constant 0 : index
    %54 = vector.load %arg9[%c0_29, %c0_30] : memref<16x1xf32, #tpu.memory_space<vmem>>, vector<16x1xf32>
    %55 = vector.broadcast %54 : vector<16x1xf32> to vector<16x32xf32>
    %56 = arith.addf %53, %55 : vector<16x32xf32>
    %cst_31 = arith.constant 0.000000e+00 : f32
    %57 = vector.broadcast %cst_31 : f32 to vector<16x32xf32>
    %58 = arith.maximumf %56, %57 : vector<16x32xf32>
    %c0_32 = arith.constant 0 : index
    %c0_33 = arith.constant 0 : index
    %59 = vector.load %arg10[%c0_32, %c0_33] : memref<16x16xbf16, #tpu.memory_space<vmem>>, vector<16x16xbf16>
    %60 = arith.truncf %58 : vector<16x32xf32> to vector<16x32xbf16>
    %cst_34 = arith.constant dense<0.000000e+00> : vector<16x32xf32>
    %61 = tpu.matmul %59, %60, %cst_34 {dimension_numbers = #tpu.dot_dimension_numbers<[1], [0], [0], [1], [0, 0, 1, 1], [], []>} : vector<16x16xbf16>, vector<16x32xbf16>, vector<16x32xf32> -> vector<16x32xf32>
    %c0_35 = arith.constant 0 : index
    %c0_36 = arith.constant 0 : index
    %62 = vector.load %arg11[%c0_35, %c0_36] : memref<16x1xf32, #tpu.memory_space<vmem>>, vector<16x1xf32>
    %63 = vector.broadcast %62 : vector<16x1xf32> to vector<16x32xf32>
    %64 = arith.addf %61, %63 : vector<16x32xf32>
    %c0_37 = arith.constant 0 : index
    %c0_38 = arith.constant 0 : index
    %c0_39 = arith.constant 0 : index
    %65 = vector.load %arg1[%c0_37, %c0_38, %c0_39] : memref<1x16x32xf32, #tpu.memory_space<vmem>>, vector<1x16x32xf32>
    %66 = vector.shape_cast %65 : vector<1x16x32xf32> to vector<16x32xf32>
    %67 = arith.addf %64, %66 : vector<16x32xf32>
    %c0_40 = arith.constant 0 : index
    %c0_41 = arith.constant 0 : index
    %c0_42 = arith.constant 0 : index
    %68 = vector.load %arg12[%c0_40, %c0_41, %c0_42] : memref<1x16x32xf32, #tpu.memory_space<vmem>>, vector<1x16x32xf32>
    %69 = vector.shape_cast %68 : vector<1x16x32xf32> to vector<16x32xf32>
    %70 = vector.shape_cast %67 : vector<16x32xf32> to vector<1x16x32xf32>
    tpu.vector_store %arg12[%c0_40, %c0_41, %c0_42], %70 {strides = array<i32>} : memref<1x16x32xf32, #tpu.memory_space<vmem>>, vector<1x16x32xf32>,
    return
  }
  func.func @transform_0(%arg0: i32) -> (i32, i32, i32) {
    %c0_i32 = arith.constant 0 : i32
    %c0_i32_0 = arith.constant 0 : i32
    %c0_i32_1 = arith.constant 0 : i32
    return %arg0, %c0_i32, %c0_i32_0 : i32, i32, i32
  }
  func.func @transform_1(%arg0: i32) -> (i32, i32) {
    %c0_i32 = arith.constant 0 : i32
    %c0_i32_0 = arith.constant 0 : i32
    %c0_i32_1 = arith.constant 0 : i32
    return %c0_i32, %c0_i32_0 : i32, i32
  }
  func.func @transform_2(%arg0: i32) -> (i32, i32) {
    %c0_i32 = arith.constant 0 : i32
    %c0_i32_0 = arith.constant 0 : i32
    %c0_i32_1 = arith.constant 0 : i32
    return %c0_i32, %c0_i32_0 : i32, i32
  }
  func.func @transform_3(%arg0: i32) -> (i32, i32) {
    %c0_i32 = arith.constant 0 : i32
    %c0_i32_0 = arith.constant 0 : i32
    %c0_i32_1 = arith.constant 0 : i32
    return %c0_i32, %c0_i32_0 : i32, i32
  }
  func.func @transform_4(%arg0: i32) -> (i32, i32) {
    %c0_i32 = arith.constant 0 : i32
    %c0_i32_0 = arith.constant 0 : i32
    %c0_i32_1 = arith.constant 0 : i32
    return %c0_i32, %c0_i32_0 : i32, i32
  }
  func.func @transform_5(%arg0: i32) -> (i32, i32) {
    %c0_i32 = arith.constant 0 : i32
    %c0_i32_0 = arith.constant 0 : i32
    %c0_i32_1 = arith.constant 0 : i32
    return %c0_i32, %c0_i32_0 : i32, i32
  }
  func.func @transform_6(%arg0: i32) -> (i32, i32) {
    %c0_i32 = arith.constant 0 : i32
    %c0_i32_0 = arith.constant 0 : i32
    %c0_i32_1 = arith.constant 0 : i32
    return %c0_i32, %c0_i32_0 : i32, i32
  }
  func.func @transform_7(%arg0: i32) -> (i32, i32) {
    %c0_i32 = arith.constant 0 : i32
    %c0_i32_0 = arith.constant 0 : i32
    %c0_i32_1 = arith.constant 0 : i32
    return %c0_i32, %c0_i32_0 : i32, i32
  }
  func.func @transform_8(%arg0: i32) -> (i32, i32) {
    %c0_i32 = arith.constant 0 : i32
    %c0_i32_0 = arith.constant 0 : i32
    %c0_i32_1 = arith.constant 0 : i32
    return %c0_i32, %c0_i32_0 : i32, i32
  }
  func.func @transform_9(%arg0: i32) -> (i32, i32) {
    %c0_i32 = arith.constant 0 : i32
    %c0_i32_0 = arith.constant 0 : i32
    %c0_i32_1 = arith.constant 0 : i32
    return %c0_i32, %c0_i32_0 : i32, i32
  }
  func.func @transform_10(%arg0: i32) -> (i32, i32) {
    %c0_i32 = arith.constant 0 : i32
    %c0_i32_0 = arith.constant 0 : i32
    %c0_i32_1 = arith.constant 0 : i32
    return %c0_i32, %c0_i32_0 : i32, i32
  }
  func.func @transform_11(%arg0: i32) -> (i32, i32, i32) {
    %c0_i32 = arith.constant 0 : i32
    %c0_i32_0 = arith.constant 0 : i32
    %c0_i32_1 = arith.constant 0 : i32
    return %arg0, %c0_i32, %c0_i32_0 : i32, i32, i32
  }
}

</mosaic_0001>

<llo_original>
// kernel: tpu_custom_call.1
$region0: #{tpu_custom_call.1}
  #allocation0 [shape = 'u32[]', space=smem, size = 0x4, offset = 0x4, fixed_abs, tag = 'smem constant byte address 0x4 - core index']
  #allocation1 [shape = 'u32[144,128]{1,0:T(1,128)}', space=vmem, size = 0x12000, scoped, tag = 'internal scratch']
  %s0 = inlined_call_operand.vmem [shape: f32[2,16,32], index: 0, kind: input, shape index: {}]
  %s1 = inlined_call_operand.vmem [shape: bf16[16,16], index: 1, kind: input, shape index: {}]
  %s2 = inlined_call_operand.vmem [shape: bf16[16,16], index: 2, kind: input, shape index: {}]
  %s3 = inlined_call_operand.vmem [shape: bf16[16,16], index: 3, kind: input, shape index: {}]
  %s4 = inlined_call_operand.vmem [shape: f32[16,1], index: 4, kind: input, shape index: {}]
  %s5 = inlined_call_operand.hbm [shape: bf16[16,16], index: 5, kind: input, shape index: {}]
  %s6 = inlined_call_operand.hbm [shape: bf16[16,16], index: 6, kind: input, shape index: {}]
  %s7 = inlined_call_operand.hbm [shape: bf16[16,16], index: 7, kind: input, shape index: {}]
  %s8 = inlined_call_operand.vmem [shape: f32[16,1], index: 8, kind: input, shape index: {}]
  %s9 = inlined_call_operand.vmem [shape: bf16[16,16], index: 9, kind: input, shape index: {}]
  %s10 = inlined_call_operand.vmem [shape: f32[16,1], index: 10, kind: input, shape index: {}]
  %s11 = inlined_call_operand.hbm [shape: f32[2,16,32], index: 11, kind: output, shape index: {}]
  %s12 = sld [smem:[#allocation0]]
  $region89: #{tpu_custom_call.1} parent=0
    _
  %s14 = ssub.s32 1, %s12
  %s15 = scalar_select 0, %s14, %s12
  $region1: #{tpu_custom_call.1} parent=0
    #allocation2 [shape = 'u8[4096]{0}', space=vmem, size = 0x1000, scoped, tag = 'input window, operand 5, single buffered']
    #allocation3 [shape = 's32[2]{0}', space=sflag, size = 0x8, scoped, tag = 'scoped memory for tpu_custom_call.1']
    #allocation4 [shape = 's32[2]{0}', space=sflag, size = 0x8, scoped, tag = 'scoped memory for tpu_custom_call.1']
    #allocation5 [shape = 'u8[4096]{0}', space=vmem, size = 0x1000, scoped, tag = 'input window, operand 6, single buffered']
    #allocation6 [shape = 's32[1]{0}', space=sflag, size = 0x4, scoped, tag = 'scoped memory for tpu_custom_call.1']
    #allocation7 [shape = 'u8[4096]{0}', space=vmem, size = 0x1000, scoped, tag = 'input window, operand 7, single buffered']
    #allocation8 [shape = 'u8[16384]{0}', space=vmem, size = 0x4000, scoped, tag = 'output window, operand 0']
    %16 = vsyncpa [#allocation3], 0
    %17 = vsyncpa [#allocation6], 0
    %18 = vsyncpa [#allocation4], 0
    %s19 = scalar_lea.sflag [#allocation4], 1
    %20 = vsyncpa %s19, 0
    loop: start=0, step=1, limit=4
    $region2: #{tpu_custom_call.1} parent=1 // loop_pre_header
      _
    $region3: #{tpu_custom_call.1} parent=1 // loop_header
      %s22 = sphi 0, %s26
      %p23 = scmp.ge.s32.totalorder %s22, 4
      %s32 = sphi 0, %s34
      %s35 = sphi 0, %s32
      %s36 = sphi 0, %s35
      %s52 = sphi 0, %s36
      %s56 = sphi 0, %s56
      %s58 = sphi 0, %s56
      %s59 = sphi 0, %s58
      %s73 = sphi 0, %s59
      %s77 = sphi 0, %s77
      %s79 = sphi 0, %s77
      %s80 = sphi 0, %s79
      %s94 = sphi 0, %s80
      %s98 = sphi 0, %s98
      %s100 = sphi 0, %s98
      %s101 = sphi 0, %s100
      %s115 = sphi 0, %s101
      %s119 = sphi 0, %s119
      %s121 = sphi 0, %s119
      %s122 = sphi 0, %s121
      %s136 = sphi 0, %s122
      %s140 = sphi 0, %s140
      %s142 = sphi 0, %s140
      %s143 = sphi 0, %s142
      %s157 = sphi 0, %s143
      %s161 = sphi 0, %s161
      %s163 = sphi 0, %s161
      %s164 = sphi 0, %s163
      %s178 = sphi 0, %s164
      %s182 = sphi 0, %s182
      %s184 = sphi 0, %s182
      %s185 = sphi 0, %s184
      %s199 = sphi 0, %s185
      %s203 = sphi 0, %s203
      %s205 = sphi 0, %s203
      %s206 = sphi 0, %s205
      %s220 = sphi 0, %s206
      %s224 = sphi 0, %s224
      %s226 = sphi 0, %s224
      %s227 = sphi 0, %s226
      %s241 = sphi 0, %s227
      %s245 = sphi 0, %s245
      %s247 = sphi 0, %s245
      %s248 = sphi 0, %s247
      %s262 = sphi 0, %s248
      %s268 = sphi 0, %s270
      %s271 = sphi 0, %s268
      %s272 = sphi 0, %s271
      %s288 = sphi 0, %s272
    $region4: #{tpu_custom_call.1} parent=1 // loop_header_branch
      %25 = sbr.rel (%p23) target = $region8
    $region5: #{tpu_custom_call.1} parent=1 // loop_body
      %s27 = ssub.s32 %s22, 1
      %s28 = ssub.s32 %s22, 2
      %s29 = sadd.s32 %s22, 1
      %s30 = ssub.s32 %s22, %s29
      %p31 = scmp.eq.s32.totalorder %s30, 0
      %s33 = sadd.s32 %s32, 1
      %s34 = scalar_select %p31, %s32, %s33
      %p37 = pneg %p31
      %p38 = scmp.eq.s32.totalorder %s22, 1
      %p39 = por %p37, %p38
      %p40 = scmp.ne.s32.totalorder %s32, %s35
      %p41 = scmp.eq.s32.totalorder %s22, 0
      %p42 = por %p40, %p41
      %p43 = scmp.ne.s32.totalorder %s32, %s35
      %p44 = scmp.eq.s32.totalorder %s27, 1
      %p45 = por %p43, %p44
      %p46 = scmp.ne.s32.totalorder %s35, %s36
      %p47 = scmp.eq.s32.totalorder %s27, 0
      %p48 = por %p46, %p47
      %p49 = scmp.ne.s32.totalorder %s35, %s36
      %p50 = scmp.eq.s32.totalorder %s28, 1
      %p51 = por %p49, %p50
      %p53 = scmp.ne.s32.totalorder %s36, %s52
      %p54 = scmp.eq.s32.totalorder %s28, 0
      %p55 = por %p53, %p54
      %s57 = sadd.s32 %s56, 1
      %p60 = scmp.eq.s32.totalorder %s22, 1
      %p61 = scmp.ne.s32.totalorder %s56, %s58
      %p62 = scmp.eq.s32.totalorder %s22, 0
      %p63 = por %p61, %p62
      %p64 = scmp.ne.s32.totalorder %s56, %s58
      %p65 = scmp.eq.s32.totalorder %s27, 1
      %p66 = por %p64, %p65
      %p67 = scmp.ne.s32.totalorder %s58, %s59
      %p68 = scmp.eq.s32.totalorder %s27, 0
      %p69 = por %p67, %p68
      %p70 = scmp.ne.s32.totalorder %s58, %s59
      %p71 = scmp.eq.s32.totalorder %s28, 1
      %p72 = por %p70, %p71
      %p74 = scmp.ne.s32.totalorder %s59, %s73
      %p75 = scmp.eq.s32.totalorder %s28, 0
      %p76 = por %p74, %p75
      %s78 = sadd.s32 %s77, 1
      %p81 = scmp.eq.s32.totalorder %s22, 1
      %p82 = scmp.ne.s32.totalorder %s77, %s79
      %p83 = scmp.eq.s32.totalorder %s22, 0
      %p84 = por %p82, %p83
      %p85 = scmp.ne.s32.totalorder %s77, %s79
      %p86 = scmp.eq.s32.totalorder %s27, 1
      %p87 = por %p85, %p86
      %p88 = scmp.ne.s32.totalorder %s79, %s80
      %p89 = scmp.eq.s32.totalorder %s27, 0
      %p90 = por %p88, %p89
      %p91 = scmp.ne.s32.totalorder %s79, %s80
      %p92 = scmp.eq.s32.totalorder %s28, 1
      %p93 = por %p91, %p92
      %p95 = scmp.ne.s32.totalorder %s80, %s94
      %p96 = scmp.eq.s32.totalorder %s28, 0
      %p97 = por %p95, %p96
      %s99 = sadd.s32 %s98, 1
      %p102 = scmp.eq.s32.totalorder %s22, 1
      %p103 = scmp.ne.s32.totalorder %s98, %s100
      %p104 = scmp.eq.s32.totalorder %s22, 0
      %p105 = por %p103, %p104
      %p106 = scmp.ne.s32.totalorder %s98, %s100
      %p107 = scmp.eq.s32.totalorder %s27, 1
      %p108 = por %p106, %p107
      %p109 = scmp.ne.s32.totalorder %s100, %s101
      %p110 = scmp.eq.s32.totalorder %s27, 0
      %p111 = por %p109, %p110
      %p112 = scmp.ne.s32.totalorder %s100, %s101
      %p113 = scmp.eq.s32.totalorder %s28, 1
      %p114 = por %p112, %p113
      %p116 = scmp.ne.s32.totalorder %s101, %s115
      %p117 = scmp.eq.s32.totalorder %s28, 0
      %p118 = por %p116, %p117
      %s120 = sadd.s32 %s119, 1
      %p123 = scmp.eq.s32.totalorder %s22, 1
      %p124 = scmp.ne.s32.totalorder %s119, %s121
      %p125 = scmp.eq.s32.totalorder %s22, 0
      %p126 = por %p124, %p125
      %p127 = scmp.ne.s32.totalorder %s119, %s121
      %p128 = scmp.eq.s32.totalorder %s27, 1
      %p129 = por %p127, %p128
      %p130 = scmp.ne.s32.totalorder %s121, %s122
      %p131 = scmp.eq.s32.totalorder %s27, 0
      %p132 = por %p130, %p131
      %p133 = scmp.ne.s32.totalorder %s121, %s122
      %p134 = scmp.eq.s32.totalorder %s28, 1
      %p135 = por %p133, %p134
      %p137 = scmp.ne.s32.totalorder %s122, %s136
      %p138 = scmp.eq.s32.totalorder %s28, 0
      %p139 = por %p137, %p138
      %s141 = sadd.s32 %s140, 1
      %p144 = scmp.eq.s32.totalorder %s22, 1
      %p145 = scmp.ne.s32.totalorder %s140, %s142
      %p146 = scmp.eq.s32.totalorder %s22, 0
      %p147 = por %p145, %p146
      %p148 = scmp.ne.s32.totalorder %s140, %s142
      %p149 = scmp.eq.s32.totalorder %s27, 1
      %p150 = por %p148, %p149
      %p151 = scmp.ne.s32.totalorder %s142, %s143
      %p152 = scmp.eq.s32.totalorder %s27, 0
      %p153 = por %p151, %p152
      %p154 = scmp.ne.s32.totalorder %s142, %s143
      %p155 = scmp.eq.s32.totalorder %s28, 1
      %p156 = por %p154, %p155
      %p158 = scmp.ne.s32.totalorder %s143, %s157
      %p159 = scmp.eq.s32.totalorder %s28, 0
      %p160 = por %p158, %p159
      %s162 = sadd.s32 %s161, 1
      %p165 = scmp.eq.s32.totalorder %s22, 1
      %p166 = scmp.ne.s32.totalorder %s161, %s163
      %p167 = scmp.eq.s32.totalorder %s22, 0
      %p168 = por %p166, %p167
      %p169 = scmp.ne.s32.totalorder %s161, %s163
      %p170 = scmp.eq.s32.totalorder %s27, 1
      %p171 = por %p169, %p170
      %p172 = scmp.ne.s32.totalorder %s163, %s164
      %p173 = scmp.eq.s32.totalorder %s27, 0
      %p174 = por %p172, %p173
      %p175 = scmp.ne.s32.totalorder %s163, %s164
      %p176 = scmp.eq.s32.totalorder %s28, 1
      %p177 = por %p175, %p176
      %p179 = scmp.ne.s32.totalorder %s164, %s178
      %p180 = scmp.eq.s32.totalorder %s28, 0
      %p181 = por %p179, %p180
      %s183 = sadd.s32 %s182, 1
      %p186 = scmp.eq.s32.totalorder %s22, 1
      %p187 = scmp.ne.s32.totalorder %s182, %s184
      %p188 = scmp.eq.s32.totalorder %s22, 0
      %p189 = por %p187, %p188
      %p190 = scmp.ne.s32.totalorder %s182, %s184
      %p191 = scmp.eq.s32.totalorder %s27, 1
      %p192 = por %p190, %p191
      %p193 = scmp.ne.s32.totalorder %s184, %s185
      %p194 = scmp.eq.s32.totalorder %s27, 0
      %p195 = por %p193, %p194
      %p196 = scmp.ne.s32.totalorder %s184, %s185
      %p197 = scmp.eq.s32.totalorder %s28, 1
      %p198 = por %p196, %p197
      %p200 = scmp.ne.s32.totalorder %s185, %s199
      %p201 = scmp.eq.s32.totalorder %s28, 0
      %p202 = por %p200, %p201
      %s204 = sadd.s32 %s203, 1
      %p207 = scmp.eq.s32.totalorder %s22, 1
      %p208 = scmp.ne.s32.totalorder %s203, %s205
      %p209 = scmp.eq.s32.totalorder %s22, 0
      %p210 = por %p208, %p209
      %p211 = scmp.ne.s32.totalorder %s203, %s205
      %p212 = scmp.eq.s32.totalorder %s27, 1
      %p213 = por %p211, %p212
      %p214 = scmp.ne.s32.totalorder %s205, %s206
      %p215 = scmp.eq.s32.totalorder %s27, 0
      %p216 = por %p214, %p215
      %p217 = scmp.ne.s32.totalorder %s205, %s206
      %p218 = scmp.eq.s32.totalorder %s28, 1
      %p219 = por %p217, %p218
      %p221 = scmp.ne.s32.totalorder %s206, %s220
      %p222 = scmp.eq.s32.totalorder %s28, 0
      %p223 = por %p221, %p222
      %s225 = sadd.s32 %s224, 1
      %p228 = scmp.eq.s32.totalorder %s22, 1
      %p229 = scmp.ne.s32.totalorder %s224, %s226
      %p230 = scmp.eq.s32.totalorder %s22, 0
      %p231 = por %p229, %p230
      %p232 = scmp.ne.s32.totalorder %s224, %s226
      %p233 = scmp.eq.s32.totalorder %s27, 1
      %p234 = por %p232, %p233
      %p235 = scmp.ne.s32.totalorder %s226, %s227
      %p236 = scmp.eq.s32.totalorder %s27, 0
      %p237 = por %p235, %p236
      %p238 = scmp.ne.s32.totalorder %s226, %s227
      %p239 = scmp.eq.s32.totalorder %s28, 1
      %p240 = por %p238, %p239
      %p242 = scmp.ne.s32.totalorder %s227, %s241
      %p243 = scmp.eq.s32.totalorder %s28, 0
      %p244 = por %p242, %p243
      %s246 = sadd.s32 %s245, 1
      %p249 = scmp.eq.s32.totalorder %s22, 1
      %p250 = scmp.ne.s32.totalorder %s245, %s247
      %p251 = scmp.eq.s32.totalorder %s22, 0
      %p252 = por %p250, %p251
      %p253 = scmp.ne.s32.totalorder %s245, %s247
      %p254 = scmp.eq.s32.totalorder %s27, 1
      %p255 = por %p253, %p254
      %p256 = scmp.ne.s32.totalorder %s247, %s248
      %p257 = scmp.eq.s32.totalorder %s27, 0
      %p258 = por %p256, %p257
      %p259 = scmp.ne.s32.totalorder %s247, %s248
      %p260 = scmp.eq.s32.totalorder %s28, 1
      %p261 = por %p259, %p260
      %p263 = scmp.ne.s32.totalorder %s248, %s262
      %p264 = scmp.eq.s32.totalorder %s28, 0
      %p265 = por %p263, %p264
      %s266 = ssub.s32 %s22, %s29
      %p267 = scmp.eq.s32.totalorder %s266, 0
      %s269 = sadd.s32 %s268, 1
      %s270 = scalar_select %p267, %s268, %s269
      %p273 = pneg %p267
      %p274 = scmp.eq.s32.totalorder %s22, 1
      %p275 = por %p273, %p274
      %p276 = scmp.ne.s32.totalorder %s268, %s271
      %p277 = scmp.eq.s32.totalorder %s22, 0
      %p278 = por %p276, %p277
      %p279 = scmp.ne.s32.totalorder %s268, %s271
      %p280 = scmp.eq.s32.totalorder %s27, 1
      %p281 = por %p279, %p280
      %p282 = scmp.ne.s32.totalorder %s271, %s272
      %p283 = scmp.eq.s32.totalorder %s27, 0
      %p284 = por %p282, %p283
      %p285 = scmp.ne.s32.totalorder %s271, %s272
      %p286 = scmp.eq.s32.totalorder %s28, 1
      %p287 = por %p285, %p286
      %p289 = scmp.ne.s32.totalorder %s272, %s288
      %p290 = scmp.eq.s32.totalorder %s28, 0
      %p291 = por %p289, %p290
      %p292 = scmp.le.s32.totalorder 1, %s22
      %p293 = scmp.lt.s32.totalorder %s22, 3
      %p294 = pnand %p292, %p293
      %p295 = pneg %p294
      // Predicated region
      $region9: #{tpu_custom_call.1} parent=5 // pred_check
        _
      $region10: #{tpu_custom_call.1} parent=5 // pred_check_branch
        %297 = sbr.rel (%p294) target = $region12
      $region11: #{tpu_custom_call.1} parent=5 // pred_region
        %s298 = ssub.s32 %s22, 1
        // Predicated region
        $region13: #{tpu_custom_call.1} parent=11 // pred_check
          %p299 = pneg %p69
        $region14: #{tpu_custom_call.1} parent=11 // pred_check_branch
          %301 = sbr.rel (%p299) target = $region16
        $region15: #{tpu_custom_call.1} parent=11 // pred_region
          _
        $region16: #{tpu_custom_call.1} parent=11 // pred_fallthru
          _
        // Predicated region
        $region17: #{tpu_custom_call.1} parent=11 // pred_check
          %p302 = pneg %p90
        $region18: #{tpu_custom_call.1} parent=11 // pred_check_branch
          %304 = sbr.rel (%p302) target = $region20
        $region19: #{tpu_custom_call.1} parent=11 // pred_region
          _
        $region20: #{tpu_custom_call.1} parent=11 // pred_fallthru
          _
        // Predicated region
        $region21: #{tpu_custom_call.1} parent=11 // pred_check
          %p305 = pneg %p111
        $region22: #{tpu_custom_call.1} parent=11 // pred_check_branch
          %307 = sbr.rel (%p305) target = $region24
        $region23: #{tpu_custom_call.1} parent=11 // pred_region
          _
        $region24: #{tpu_custom_call.1} parent=11 // pred_fallthru
          _
        // Predicated region
        $region25: #{tpu_custom_call.1} parent=11 // pred_check
          %p308 = pneg %p132
        $region26: #{tpu_custom_call.1} parent=11 // pred_check_branch
          %310 = sbr.rel (%p308) target = $region28
        $region27: #{tpu_custom_call.1} parent=11 // pred_region
          _
        $region28: #{tpu_custom_call.1} parent=11 // pred_fallthru
          _
        // Predicated region
        $region29: #{tpu_custom_call.1} parent=11 // pred_check
          %p311 = pneg %p153
        $region30: #{tpu_custom_call.1} parent=11 // pred_check_branch
          %313 = sbr.rel (%p311) target = $region32
        $region31: #{tpu_custom_call.1} parent=11 // pred_region
          %s315 = ssub.s32 128, 128
          %316 = vsyncadd [#allocation3], %s315
          %s317 = sshll.u32 [#allocation2], 4
          %s318 = int_to_ptr.vmem [resolvable:$true] %s317
          %323 = dma.hbm_to_vmem [thread:$0]  %s5, 128, %s318, [#allocation3], 64, 64, 4
        $region32: #{tpu_custom_call.1} parent=11 // pred_fallthru
          _
        // Predicated region
        $region33: #{tpu_custom_call.1} parent=11 // pred_check
          %p324 = pneg %p174
        $region34: #{tpu_custom_call.1} parent=11 // pred_check_branch
          %326 = sbr.rel (%p324) target = $region36
        $region35: #{tpu_custom_call.1} parent=11 // pred_region
          %s328 = ssub.s32 128, 128
          %329 = vsyncadd [#allocation6], %s328
          %s330 = sshll.u32 [#allocation5], 4
          %s331 = int_to_ptr.vmem [resolvable:$true] %s330
          %336 = dma.hbm_to_vmem [thread:$0]  %s6, 128, %s331, [#allocation6], 64, 64, 4
        $region36: #{tpu_custom_call.1} parent=11 // pred_fallthru
          _
        // Predicated region
        $region37: #{tpu_custom_call.1} parent=11 // pred_check
          %p337 = pneg %p195
        $region38: #{tpu_custom_call.1} parent=11 // pred_check_branch
          %339 = sbr.rel (%p337) target = $region40
        $region39: #{tpu_custom_call.1} parent=11 // pred_region
          %s341 = ssub.s32 128, 128
          %342 = vsyncadd [#allocation6], %s341
          %s343 = sshll.u32 [#allocation7], 4
          %s344 = int_to_ptr.vmem [resolvable:$true] %s343
          %349 = dma.hbm_to_vmem [thread:$0]  %s7, 128, %s344, [#allocation6], 64, 64, 4
        $region40: #{tpu_custom_call.1} parent=11 // pred_fallthru
          _
        // Predicated region
        $region41: #{tpu_custom_call.1} parent=11 // pred_check
          %p350 = pneg %p216
        $region42: #{tpu_custom_call.1} parent=11 // pred_check_branch
          %352 = sbr.rel (%p350) target = $region44
        $region43: #{tpu_custom_call.1} parent=11 // pred_region
          _
        $region44: #{tpu_custom_call.1} parent=11 // pred_fallthru
          _
        // Predicated region
        $region45: #{tpu_custom_call.1} parent=11 // pred_check
          %p353 = pneg %p237
        $region46: #{tpu_custom_call.1} parent=11 // pred_check_branch
          %355 = sbr.rel (%p353) target = $region48
        $region47: #{tpu_custom_call.1} parent=11 // pred_region
          _
        $region48: #{tpu_custom_call.1} parent=11 // pred_fallthru
          _
        // Predicated region
        $region49: #{tpu_custom_call.1} parent=11 // pred_check
          %p356 = pneg %p258
        $region50: #{tpu_custom_call.1} parent=11 // pred_check_branch
          %358 = sbr.rel (%p356) target = $region52
        $region51: #{tpu_custom_call.1} parent=11 // pred_region
          _
        $region52: #{tpu_custom_call.1} parent=11 // pred_fallthru
          _
      $region12: #{tpu_custom_call.1} parent=5 // pred_fallthru
        _
      %p359 = scmp.lt.s32.totalorder %s22, 2
      // Predicated region
      $region53: #{tpu_custom_call.1} parent=5 // pred_check
        %p360 = pneg %p359
      $region54: #{tpu_custom_call.1} parent=5 // pred_check_branch
        %362 = sbr.rel (%p360) target = $region56
      $region55: #{tpu_custom_call.1} parent=5 // pred_region
        // Predicated region
        $region57: #{tpu_custom_call.1} parent=55 // pred_check
          %p363 = pneg %p42
        $region58: #{tpu_custom_call.1} parent=55 // pred_check_branch
          %365 = sbr.rel (%p363) target = $region60
        $region59: #{tpu_custom_call.1} parent=55 // pred_region
          %p366 = scmp.lt.s32.totalorder %s22, 1
          %s367 = scalar_select %p366, %s22, 1
          %s368 = smul.addr %s367, 2
          %s369 = smul.addr %s368, 8
          %s370 = scalar_lea.vmem %s0, %s369
        $region60: #{tpu_custom_call.1} parent=55 // pred_fallthru
          _
      $region56: #{tpu_custom_call.1} parent=5 // pred_fallthru
        _
      %p371 = scmp.le.s32.totalorder 1, %s22
      %p372 = scmp.lt.s32.totalorder %s22, 3
      %p373 = pnand %p371, %p372
      %p374 = pneg %p373
      // Predicated region
      $region61: #{tpu_custom_call.1} parent=5 // pred_check
        _
      $region62: #{tpu_custom_call.1} parent=5 // pred_check_branch
        %376 = sbr.rel (%p373) target = $region64
      $region63: #{tpu_custom_call.1} parent=5 // pred_region
        %s377 = ssub.s32 %s22, 1
        // Predicated region
        $region65: #{tpu_custom_call.1} parent=63 // pred_check
          %p378 = pneg %p153
        $region66: #{tpu_custom_call.1} parent=63 // pred_check_branch
          %380 = sbr.rel (%p378) target = $region68
        $region67: #{tpu_custom_call.1} parent=63 // pred_region
          %381 = dma.done [#allocation3], 128
        $region68: #{tpu_custom_call.1} parent=63 // pred_fallthru
          _
        // Predicated region
        $region69: #{tpu_custom_call.1} parent=63 // pred_check
          %p382 = pneg %p174
        $region70: #{tpu_custom_call.1} parent=63 // pred_check_branch
          %384 = sbr.rel (%p382) target = $region72
        $region71: #{tpu_custom_call.1} parent=63 // pred_region
          %385 = dma.done [#allocation6], 128
        $region72: #{tpu_custom_call.1} parent=63 // pred_fallthru
          _
        // Predicated region
        $region73: #{tpu_custom_call.1} parent=63 // pred_check
          %p386 = pneg %p195
        $region74: #{tpu_custom_call.1} parent=63 // pred_check_branch
          %388 = sbr.rel (%p386) target = $region76
        $region75: #{tpu_custom_call.1} parent=63 // pred_region
          %389 = dma.done [#allocation6], 128
        $region76: #{tpu_custom_call.1} parent=63 // pred_fallthru
          _
        %p390 = scmp.lt.s32.totalorder %s27, 1
        %s391 = scalar_select %p390, %s27, 1
        %s392 = smul.addr %s391, 2
        %s393 = smul.addr %s392, 8
        %s394 = scalar_lea.vmem %s0, %s393
        %p395 = pneg %p48
        %p396 = pneg %p45
        %p397 = pneg %p69
        %p398 = pneg %p66
        %p399 = pneg %p90
        %p400 = pneg %p87
        %p401 = pneg %p111
        %p402 = pneg %p108
        %p403 = pneg %p132
        %p404 = pneg %p129
        %p405 = pneg %p153
        %p406 = pneg %p150
        %p407 = pneg %p174
        %p408 = pneg %p171
        %p409 = pneg %p195
        %p410 = pneg %p192
        %p411 = pneg %p216
        %p412 = pneg %p213
        %p413 = pneg %p237
        %p414 = pneg %p234
        %p415 = pneg %p258
        %p416 = pneg %p255
        %p417 = pneg %p284
        %p418 = pneg %p281
        %s419 = sand.u32 %s271, 1
        %s420 = scalar_lea.sflag [#allocation4], %s419
        %s421 = sand.u32 %s271, 1
        %s422 = smul.addr %s421, 16
        %s423 = scalar_lea.vmem [#allocation8], %s422
        %p424 = scmp.lt.s32.totalorder %s27, 1
        %s425 = scalar_select %p424, %s27, 1
        %s426 = smul.addr %s425, 2
        %s427 = smul.addr %s426, 8
        %s428 = scalar_lea.vmem %s0, %s427
        %v430 = vlaneseq
        %v431 = vand.u32 %v430, 127
        %vm432 = vcmp.eq.s32.totalorder %v431, 0
        %vm433 = vcmp.eq.s32.totalorder %v431, 31
        %v434 = vld [vmem:[%s428] sm:$0xff]
        %v435 = vld [vmem:[%s428 + $0x8] sm:$0xff]
        %vm436 = vcmask 1047808
        %437 = vrot.lane.b32.xlu0 %v434, 32
        %v438 = vpop.permute.xlu0 %437
        %v439 = vsel %vm436, %v438, %v434
        %440 = vrot.lane.b32.xlu0 %v435, 32
        %v441 = vpop.permute.xlu0 %440
        %v442 = vsel %vm436, %v441, %v435
        %443 = vrot.lane.b32.xlu0 %v439, 32
        %v444 = vpop.permute.xlu0 %443
        %445 = vrot.lane.b32.xlu0 %v442, 32
        %v446 = vpop.permute.xlu0 %445
        %v447 = vsel %vm436, %v444, %v434
        %v448 = vsel %vm436, %v446, %v435
        %v449 = vsel %vm432, 1, 0
        %vm450 = vcmp.eq.s32.totalorder %v449, 1
        %453 = vrot.lane.b32.xlu0 %v447, 97
        %v454 = vpop.permute.xlu0 %453
        %455 = vrot.lane.b32.xlu0 %v448, 97
        %v456 = vpop.permute.xlu0 %455
        %v459 = vsel %vm450, 0.0, %v454
        %v460 = vsel %vm450, 0.0, %v456
        %v461 = vsel %vm433, 1, 0
        %vm462 = vcmp.eq.s32.totalorder %v461, 1
        %463 = vrot.lane.b32.xlu0 %v447, 127
        %v464 = vpop.permute.xlu0 %463
        %465 = vrot.lane.b32.xlu0 %v448, 127
        %v466 = vpop.permute.xlu0 %465
        %v469 = vsel %vm462, 0.0, %v464
        %v470 = vsel %vm462, 0.0, %v466
        %v471 = vld [vmem:[%s2] sm:$0xf]
        %v472 = vld [vmem:[%s2 + $0x4] sm:$0xf]
        %v473 = vpack.c.bf16 %v435, %v434
        %v474 = vld [vmem:[%s1] sm:$0xf]
        %v475 = vld [vmem:[%s1 + $0x4] sm:$0xf]
        %v476 = vpack.c.bf16 %v460, %v459
        %v479 = vunpack.c.l.b16 %v474
        %v480 = vunpack.c.l.b16 %v475
        %v481 = vpack.c.b16 %v480, %v479
        %vm482 = vcmask 130048
        %v484 = vsel %vm482, %v481, 0
        %486 = vmatprep.subr.bf16.mxu0 0
        %487 = vmatpush1.bf16.msra.mxu0 0
        %488 = vmatprep.subr.bf16.mxu0 0
        %489 = vmatpush1.bf16.msra.mxu0 0
        %490 = vmatprep.subr.bf16.mxu0 0
        %491 = vmatpush1.bf16.msra.mxu0 0
        %492 = vmatprep.subr.bf16.mxu0 0
        %493 = vmatpush1.bf16.msra.mxu0 0
        %494 = vmatprep.subr.bf16.mxu0 0
        %495 = vmatpush1.bf16.msra.mxu0 0
        %496 = vmatprep.subr.bf16.mxu0 0
        %497 = vmatpush1.bf16.msra.mxu0 0
        %498 = vmatprep.subr.bf16.mxu0 0
        %499 = vmatpush1.bf16.msra.mxu0 0
        %500 = vmatprep.subr.bf16.mxu0 0
        %501 = vmatpush1.bf16.msra.mxu0 %v476
        %502 = vmatprep.subr.bf16.mxu0 0
        %503 = vmatpush2.bf16.msra.mxu0 0
        %504 = vmatprep.subr.bf16.mxu0 0
        %505 = vmatpush2.bf16.msra.mxu0 0
        %506 = vmatprep.subr.bf16.mxu0 0
        %507 = vmatpush2.bf16.msra.mxu0 0
        %508 = vmatprep.subr.bf16.mxu0 0
        %509 = vmatpush2.bf16.msra.mxu0 0
        %510 = vmatprep.subr.bf16.mxu0 0
        %511 = vmatpush2.bf16.msra.mxu0 0
        %512 = vmatprep.subr.bf16.mxu0 0
        %513 = vmatpush2.bf16.msra.mxu0 0
        %514 = vmatprep.subr.bf16.mxu0 0
        %515 = vmatpush2.bf16.msra.mxu0 0
        %516 = vmatprep.subr.bf16.mxu0 0
        %517 = vmatpush2.bf16.msra.mxu0 0
        %518 = vmatprep.mubr.bf16.mxu0 0
        %519 = vmatmul.mubr.bf16.gmra.mxu0 %v484
        %v520 = vpop.f32.mrf.mxu0
        %v521 = vadd.f32 0.0, %v520
        %v522 = vpop.f32.mrf.mxu0
        %v523 = vpop.f32.mrf.mxu0
        %v524 = vadd.f32 0.0, %v523
        %v525 = vpop.f32.mrf.mxu0
        %526 = vdwg.mxu0
        %v529 = vunpack.c.l.b16 %v471
        %v530 = vunpack.c.l.b16 %v472
        %v531 = vpack.c.b16 %v530, %v529
        %v533 = vsel %vm482, %v531, 0
        %535 = vmatprep.subr.bf16.mxu0 0
        %536 = vmatpush1.bf16.msra.mxu0 0
        %537 = vmatprep.subr.bf16.mxu0 0
        %538 = vmatpush1.bf16.msra.mxu0 0
        %539 = vmatprep.subr.bf16.mxu0 0
        %540 = vmatpush1.bf16.msra.mxu0 0
        %541 = vmatprep.subr.bf16.mxu0 0
        %542 = vmatpush1.bf16.msra.mxu0 0
        %543 = vmatprep.subr.bf16.mxu0 0
        %544 = vmatpush1.bf16.msra.mxu0 0
        %545 = vmatprep.subr.bf16.mxu0 0
        %546 = vmatpush1.bf16.msra.mxu0 0
        %547 = vmatprep.subr.bf16.mxu0 0
        %548 = vmatpush1.bf16.msra.mxu0 0
        %549 = vmatprep.subr.bf16.mxu0 0
        %550 = vmatpush1.bf16.msra.mxu0 %v473
        %551 = vmatprep.subr.bf16.mxu0 0
        %552 = vmatpush2.bf16.msra.mxu0 0
        %553 = vmatprep.subr.bf16.mxu0 0
        %554 = vmatpush2.bf16.msra.mxu0 0
        %555 = vmatprep.subr.bf16.mxu0 0
        %556 = vmatpush2.bf16.msra.mxu0 0
        %557 = vmatprep.subr.bf16.mxu0 0
        %558 = vmatpush2.bf16.msra.mxu0 0
        %559 = vmatprep.subr.bf16.mxu0 0
        %560 = vmatpush2.bf16.msra.mxu0 0
        %561 = vmatprep.subr.bf16.mxu0 0
        %562 = vmatpush2.bf16.msra.mxu0 0
        %563 = vmatprep.subr.bf16.mxu0 0
        %564 = vmatpush2.bf16.msra.mxu0 0
        %565 = vmatprep.subr.bf16.mxu0 0
        %566 = vmatpush2.bf16.msra.mxu0 0
        %567 = vmatprep.mubr.bf16.mxu0 0
        %568 = vmatmul.mubr.bf16.gmra.mxu0 %v533
        %v569 = vpop.f32.mrf.mxu0
        %v570 = vadd.f32 %v521, %v569
        %v571 = vpop.f32.mrf.mxu0
        %v572 = vpop.f32.mrf.mxu0
        %v573 = vadd.f32 %v524, %v572
        %v574 = vpop.f32.mrf.mxu0
        %575 = vdwg.mxu0
        %v576 = vld [vmem:[%s3] sm:$0xf]
        %v577 = vld [vmem:[%s3 + $0x4] sm:$0xf]
        %v578 = vpack.c.bf16 %v470, %v469
        %v581 = vunpack.c.l.b16 %v576
        %v582 = vunpack.c.l.b16 %v577
        %v583 = vpack.c.b16 %v582, %v581
        %v585 = vsel %vm482, %v583, 0
        %587 = vmatprep.subr.bf16.mxu0 0
        %588 = vmatpush1.bf16.msra.mxu0 0
        %589 = vmatprep.subr.bf16.mxu0 0
        %590 = vmatpush1.bf16.msra.mxu0 0
        %591 = vmatprep.subr.bf16.mxu0 0
        %592 = vmatpush1.bf16.msra.mxu0 0
        %593 = vmatprep.subr.bf16.mxu0 0
        %594 = vmatpush1.bf16.msra.mxu0 0
        %595 = vmatprep.subr.bf16.mxu0 0
        %596 = vmatpush1.bf16.msra.mxu0 0
        %597 = vmatprep.subr.bf16.mxu0 0
        %598 = vmatpush1.bf16.msra.mxu0 0
        %599 = vmatprep.subr.bf16.mxu0 0
        %600 = vmatpush1.bf16.msra.mxu0 0
        %601 = vmatprep.subr.bf16.mxu0 0
        %602 = vmatpush1.bf16.msra.mxu0 %v578
        %603 = vmatprep.subr.bf16.mxu0 0
        %604 = vmatpush2.bf16.msra.mxu0 0
        %605 = vmatprep.subr.bf16.mxu0 0
        %606 = vmatpush2.bf16.msra.mxu0 0
        %607 = vmatprep.subr.bf16.mxu0 0
        %608 = vmatpush2.bf16.msra.mxu0 0
        %609 = vmatprep.subr.bf16.mxu0 0
        %610 = vmatpush2.bf16.msra.mxu0 0
        %611 = vmatprep.subr.bf16.mxu0 0
        %612 = vmatpush2.bf16.msra.mxu0 0
        %613 = vmatprep.subr.bf16.mxu0 0
        %614 = vmatpush2.bf16.msra.mxu0 0
        %615 = vmatprep.subr.bf16.mxu0 0
        %616 = vmatpush2.bf16.msra.mxu0 0
        %617 = vmatprep.subr.bf16.mxu0 0
        %618 = vmatpush2.bf16.msra.mxu0 0
        %619 = vmatprep.mubr.bf16.mxu0 0
        %620 = vmatmul.mubr.bf16.gmra.mxu0 %v585
        %v621 = vpop.f32.mrf.mxu0
        %v622 = vadd.f32 0.0, %v621
        %v623 = vpop.f32.mrf.mxu0
        %v624 = vpop.f32.mrf.mxu0
        %v625 = vadd.f32 0.0, %v624
        %v626 = vpop.f32.mrf.mxu0
        %627 = vdwg.mxu0
        %v628 = vadd.f32 %v570, %v622
        %v629 = vadd.f32 %v573, %v625
        %v630 = vld [vmem:[%s4] sm:$0xff]
        %v631 = vld [vmem:[%s4 + $0x8] sm:$0xff]
        %633 = vset.pattern.permute.xlu0 0
        %634 = vperm.xlu0 %633, %v630
        %v635 = vpop.permute.xlu0 %634
        %638 = vset.pattern.permute.xlu0 0
        %639 = vperm.xlu0 %638, %v631
        %v640 = vpop.permute.xlu0 %639
        %v642 = vadd.f32 %v628, %v635
        %v643 = vadd.f32 %v629, %v640
        %v644 = vmax.f32 %v642, 0.0
        %v645 = vmax.f32 %v643, 0.0
        %646 = vrot.lane.b32.xlu0 %v644, 32
        %v647 = vpop.permute.xlu0 %646
        %v648 = vsel %vm436, %v647, %v644
        %649 = vrot.lane.b32.xlu0 %v645, 32
        %v650 = vpop.permute.xlu0 %649
        %v651 = vsel %vm436, %v650, %v645
        %652 = vrot.lane.b32.xlu0 %v648, 32
        %v653 = vpop.permute.xlu0 %652
        %654 = vrot.lane.b32.xlu0 %v651, 32
        %v655 = vpop.permute.xlu0 %654
        %v656 = vsel %vm436, %v653, %v644
        %v657 = vsel %vm436, %v655, %v645
        %660 = vrot.lane.b32.xlu0 %v656, 97
        %v661 = vpop.permute.xlu0 %660
        %662 = vrot.lane.b32.xlu0 %v657, 97
        %v663 = vpop.permute.xlu0 %662
        %v666 = vsel %vm450, 0.0, %v661
        %v667 = vsel %vm450, 0.0, %v663
        %668 = vrot.lane.b32.xlu0 %v656, 127
        %v669 = vpop.permute.xlu0 %668
        %670 = vrot.lane.b32.xlu0 %v657, 127
        %v671 = vpop.permute.xlu0 %670
        %v674 = vsel %vm462, 0.0, %v669
        %v675 = vsel %vm462, 0.0, %v671
        %v676 = vld [vmem:[#allocation5] sm:$0xf]
        %v677 = vld [vmem:[#allocation5 + $0x4] sm:$0xf]
        %v678 = vpack.c.bf16 %v645, %v644
        %v679 = vld [vmem:[#allocation2] sm:$0xf]
        %v680 = vld [vmem:[#allocation2 + $0x4] sm:$0xf]
        %v681 = vpack.c.bf16 %v667, %v666
        %v684 = vunpack.c.l.b16 %v679
        %v685 = vunpack.c.l.b16 %v680
        %v686 = vpack.c.b16 %v685, %v684
        %v688 = vsel %vm482, %v686, 0
        %690 = vmatprep.subr.bf16.mxu0 0
        %691 = vmatpush1.bf16.msra.mxu0 0
        %692 = vmatprep.subr.bf16.mxu0 0
        %693 = vmatpush1.bf16.msra.mxu0 0
        %694 = vmatprep.subr.bf16.mxu0 0
        %695 = vmatpush1.bf16.msra.mxu0 0
        %696 = vmatprep.subr.bf16.mxu0 0
        %697 = vmatpush1.bf16.msra.mxu0 0
        %698 = vmatprep.subr.bf16.mxu0 0
        %699 = vmatpush1.bf16.msra.mxu0 0
        %700 = vmatprep.subr.bf16.mxu0 0
        %701 = vmatpush1.bf16.msra.mxu0 0
        %702 = vmatprep.subr.bf16.mxu0 0
        %703 = vmatpush1.bf16.msra.mxu0 0
        %704 = vmatprep.subr.bf16.mxu0 0
        %705 = vmatpush1.bf16.msra.mxu0 %v681
        %706 = vmatprep.subr.bf16.mxu0 0
        %707 = vmatpush2.bf16.msra.mxu0 0
        %708 = vmatprep.subr.bf16.mxu0 0
        %709 = vmatpush2.bf16.msra.mxu0 0
        %710 = vmatprep.subr.bf16.mxu0 0
        %711 = vmatpush2.bf16.msra.mxu0 0
        %712 = vmatprep.subr.bf16.mxu0 0
        %713 = vmatpush2.bf16.msra.mxu0 0
        %714 = vmatprep.subr.bf16.mxu0 0
        %715 = vmatpush2.bf16.msra.mxu0 0
        %716 = vmatprep.subr.bf16.mxu0 0
        %717 = vmatpush2.bf16.msra.mxu0 0
        %718 = vmatprep.subr.bf16.mxu0 0
        %719 = vmatpush2.bf16.msra.mxu0 0
        %720 = vmatprep.subr.bf16.mxu0 0
        %721 = vmatpush2.bf16.msra.mxu0 0
        %722 = vmatprep.mubr.bf16.mxu0 0
        %723 = vmatmul.mubr.bf16.gmra.mxu0 %v688
        %v724 = vpop.f32.mrf.mxu0
        %v725 = vadd.f32 0.0, %v724
        %v726 = vpop.f32.mrf.mxu0
        %v727 = vpop.f32.mrf.mxu0
        %v728 = vadd.f32 0.0, %v727
        %v729 = vpop.f32.mrf.mxu0
        %730 = vdwg.mxu0
        %v733 = vunpack.c.l.b16 %v676
        %v734 = vunpack.c.l.b16 %v677
        %v735 = vpack.c.b16 %v734, %v733
        %v737 = vsel %vm482, %v735, 0
        %739 = vmatprep.subr.bf16.mxu0 0
        %740 = vmatpush1.bf16.msra.mxu0 0
        %741 = vmatprep.subr.bf16.mxu0 0
        %742 = vmatpush1.bf16.msra.mxu0 0
        %743 = vmatprep.subr.bf16.mxu0 0
        %744 = vmatpush1.bf16.msra.mxu0 0
        %745 = vmatprep.subr.bf16.mxu0 0
        %746 = vmatpush1.bf16.msra.mxu0 0
        %747 = vmatprep.subr.bf16.mxu0 0
        %748 = vmatpush1.bf16.msra.mxu0 0
        %749 = vmatprep.subr.bf16.mxu0 0
        %750 = vmatpush1.bf16.msra.mxu0 0
        %751 = vmatprep.subr.bf16.mxu0 0
        %752 = vmatpush1.bf16.msra.mxu0 0
        %753 = vmatprep.subr.bf16.mxu0 0
        %754 = vmatpush1.bf16.msra.mxu0 %v678
        %755 = vmatprep.subr.bf16.mxu0 0
        %756 = vmatpush2.bf16.msra.mxu0 0
        %757 = vmatprep.subr.bf16.mxu0 0
        %758 = vmatpush2.bf16.msra.mxu0 0
        %759 = vmatprep.subr.bf16.mxu0 0
        %760 = vmatpush2.bf16.msra.mxu0 0
        %761 = vmatprep.subr.bf16.mxu0 0
        %762 = vmatpush2.bf16.msra.mxu0 0
        %763 = vmatprep.subr.bf16.mxu0 0
        %764 = vmatpush2.bf16.msra.mxu0 0
        %765 = vmatprep.subr.bf16.mxu0 0
        %766 = vmatpush2.bf16.msra.mxu0 0
        %767 = vmatprep.subr.bf16.mxu0 0
        %768 = vmatpush2.bf16.msra.mxu0 0
        %769 = vmatprep.subr.bf16.mxu0 0
        %770 = vmatpush2.bf16.msra.mxu0 0
        %771 = vmatprep.mubr.bf16.mxu0 0
        %772 = vmatmul.mubr.bf16.gmra.mxu0 %v737
        %v773 = vpop.f32.mrf.mxu0
        %v774 = vadd.f32 %v725, %v773
        %v775 = vpop.f32.mrf.mxu0
        %v776 = vpop.f32.mrf.mxu0
        %v777 = vadd.f32 %v728, %v776
        %v778 = vpop.f32.mrf.mxu0
        %779 = vdwg.mxu0
        %v780 = vld [vmem:[#allocation7] sm:$0xf]
        %v781 = vld [vmem:[#allocation7 + $0x4] sm:$0xf]
        %v782 = vpack.c.bf16 %v675, %v674
        %v785 = vunpack.c.l.b16 %v780
        %v786 = vunpack.c.l.b16 %v781
        %v787 = vpack.c.b16 %v786, %v785
        %v789 = vsel %vm482, %v787, 0
        %791 = vmatprep.subr.bf16.mxu0 0
        %792 = vmatpush1.bf16.msra.mxu0 0
        %793 = vmatprep.subr.bf16.mxu0 0
        %794 = vmatpush1.bf16.msra.mxu0 0
        %795 = vmatprep.subr.bf16.mxu0 0
        %796 = vmatpush1.bf16.msra.mxu0 0
        %797 = vmatprep.subr.bf16.mxu0 0
        %798 = vmatpush1.bf16.msra.mxu0 0
        %799 = vmatprep.subr.bf16.mxu0 0
        %800 = vmatpush1.bf16.msra.mxu0 0
        %801 = vmatprep.subr.bf16.mxu0 0
        %802 = vmatpush1.bf16.msra.mxu0 0
        %803 = vmatprep.subr.bf16.mxu0 0
        %804 = vmatpush1.bf16.msra.mxu0 0
        %805 = vmatprep.subr.bf16.mxu0 0
        %806 = vmatpush1.bf16.msra.mxu0 %v782
        %807 = vmatprep.subr.bf16.mxu0 0
        %808 = vmatpush2.bf16.msra.mxu0 0
        %809 = vmatprep.subr.bf16.mxu0 0
        %810 = vmatpush2.bf16.msra.mxu0 0
        %811 = vmatprep.subr.bf16.mxu0 0
        %812 = vmatpush2.bf16.msra.mxu0 0
        %813 = vmatprep.subr.bf16.mxu0 0
        %814 = vmatpush2.bf16.msra.mxu0 0
        %815 = vmatprep.subr.bf16.mxu0 0
        %816 = vmatpush2.bf16.msra.mxu0 0
        %817 = vmatprep.subr.bf16.mxu0 0
        %818 = vmatpush2.bf16.msra.mxu0 0
        %819 = vmatprep.subr.bf16.mxu0 0
        %820 = vmatpush2.bf16.msra.mxu0 0
        %821 = vmatprep.subr.bf16.mxu0 0
        %822 = vmatpush2.bf16.msra.mxu0 0
        %823 = vmatprep.mubr.bf16.mxu0 0
        %824 = vmatmul.mubr.bf16.gmra.mxu0 %v789
        %v825 = vpop.f32.mrf.mxu0
        %v826 = vadd.f32 0.0, %v825
        %v827 = vpop.f32.mrf.mxu0
        %v828 = vpop.f32.mrf.mxu0
        %v829 = vadd.f32 0.0, %v828
        %v830 = vpop.f32.mrf.mxu0
        %831 = vdwg.mxu0
        %v832 = vadd.f32 %v774, %v826
        %v833 = vadd.f32 %v777, %v829
        %v834 = vld [vmem:[%s8] sm:$0xff]
        %v835 = vld [vmem:[%s8 + $0x8] sm:$0xff]
        %837 = vset.pattern.permute.xlu0 0
        %838 = vperm.xlu0 %837, %v834
        %v839 = vpop.permute.xlu0 %838
        %842 = vset.pattern.permute.xlu0 0
        %843 = vperm.xlu0 %842, %v835
        %v844 = vpop.permute.xlu0 %843
        %v846 = vadd.f32 %v832, %v839
        %v847 = vadd.f32 %v833, %v844
        %v848 = vmax.f32 %v846, 0.0
        %v849 = vmax.f32 %v847, 0.0
        %v850 = vld [vmem:[%s9] sm:$0xf]
        %v851 = vld [vmem:[%s9 + $0x4] sm:$0xf]
        %v852 = vpack.c.bf16 %v849, %v848
        %v853 = vld [vmem:[%s10] sm:$0xff]
        %v854 = vld [vmem:[%s10 + $0x8] sm:$0xff]
        %856 = vset.pattern.permute.xlu0 0
        %857 = vperm.xlu0 %856, %v853
        %v858 = vpop.permute.xlu0 %857
        %861 = vset.pattern.permute.xlu0 0
        %862 = vperm.xlu0 %861, %v854
        %v863 = vpop.permute.xlu0 %862
        %v867 = vunpack.c.l.b16 %v850
        %v868 = vunpack.c.l.b16 %v851
        %v869 = vpack.c.b16 %v868, %v867
        %v871 = vsel %vm482, %v869, 0
        %873 = vmatprep.subr.bf16.mxu0 0
        %874 = vmatpush1.bf16.msra.mxu0 0
        %875 = vmatprep.subr.bf16.mxu0 0
        %876 = vmatpush1.bf16.msra.mxu0 0
        %877 = vmatprep.subr.bf16.mxu0 0
        %878 = vmatpush1.bf16.msra.mxu0 0
        %879 = vmatprep.subr.bf16.mxu0 0
        %880 = vmatpush1.bf16.msra.mxu0 0
        %881 = vmatprep.subr.bf16.mxu0 0
        %882 = vmatpush1.bf16.msra.mxu0 0
        %883 = vmatprep.subr.bf16.mxu0 0
        %884 = vmatpush1.bf16.msra.mxu0 0
        %885 = vmatprep.subr.bf16.mxu0 0
        %886 = vmatpush1.bf16.msra.mxu0 0
        %887 = vmatprep.subr.bf16.mxu0 0
        %888 = vmatpush1.bf16.msra.mxu0 %v852
        %889 = vmatprep.subr.bf16.mxu0 0
        %890 = vmatpush2.bf16.msra.mxu0 0
        %891 = vmatprep.subr.bf16.mxu0 0
        %892 = vmatpush2.bf16.msra.mxu0 0
        %893 = vmatprep.subr.bf16.mxu0 0
        %894 = vmatpush2.bf16.msra.mxu0 0
        %895 = vmatprep.subr.bf16.mxu0 0
        %896 = vmatpush2.bf16.msra.mxu0 0
        %897 = vmatprep.subr.bf16.mxu0 0
        %898 = vmatpush2.bf16.msra.mxu0 0
        %899 = vmatprep.subr.bf16.mxu0 0
        %900 = vmatpush2.bf16.msra.mxu0 0
        %901 = vmatprep.subr.bf16.mxu0 0
        %902 = vmatpush2.bf16.msra.mxu0 0
        %903 = vmatprep.subr.bf16.mxu0 0
        %904 = vmatpush2.bf16.msra.mxu0 0
        %905 = vmatprep.mubr.bf16.mxu0 0
        %906 = vmatmul.mubr.bf16.gmra.mxu0 %v871
        %v907 = vpop.f32.mrf.mxu0
        %v908 = vadd.f32 %v858, %v907
        %v909 = vpop.f32.mrf.mxu0
        %v910 = vpop.f32.mrf.mxu0
        %v911 = vadd.f32 %v863, %v910
        %v912 = vpop.f32.mrf.mxu0
        %913 = vdwg.mxu0
        %v914 = vadd.f32 %v908, %v434
        %v915 = vadd.f32 %v911, %v435
        %vm916 = vcmask 261120
        %917 = vst.msk [vmem:[%s423] sm:$0xff] %vm916, %v914
        %918 = vst.msk [vmem:[%s423 + $0x8] sm:$0xff] %vm916, %v915
        %s919 = sand.u32 %s271, 1
        %s920 = scalar_lea.sflag [#allocation4], %s919
        %s921 = sand.u32 %s271, 1
        %s922 = smul.addr %s921, 16
        %s923 = scalar_lea.vmem [#allocation8], %s922
        // Predicated region
        $region77: #{tpu_custom_call.1} parent=63 // pred_check
          %p924 = pneg %p281
        $region78: #{tpu_custom_call.1} parent=63 // pred_check_branch
          %926 = sbr.rel (%p924) target = $region80
        $region79: #{tpu_custom_call.1} parent=63 // pred_region
          %s928 = ssub.s32 256, 256
          %929 = vsyncadd %s920, %s928
          %s930 = smul.addr %s27, 2
          %s931 = smul.addr %s930, 128
          %s932 = scalar_lea.hbm %s11, %s931
          %s933 = sshll.u32 %s923, 4
          %s934 = int_to_ptr.vmem [resolvable:$true] %s933
          %939 = dma.vmem_to_hbm [thread:$0]  %s934, 256, %s932, %s920, 128, 128, 8
        $region80: #{tpu_custom_call.1} parent=63 // pred_fallthru
          _
      $region64: #{tpu_custom_call.1} parent=5 // pred_fallthru
        _
      %p940 = scmp.le.s32.totalorder 2, %s22
      // Predicated region
      $region81: #{tpu_custom_call.1} parent=5 // pred_check
        %p941 = pneg %p940
      $region82: #{tpu_custom_call.1} parent=5 // pred_check_branch
        %943 = sbr.rel (%p941) target = $region84
      $region83: #{tpu_custom_call.1} parent=5 // pred_region
        %s944 = ssub.s32 %s22, 2
        // Predicated region
        $region85: #{tpu_custom_call.1} parent=83 // pred_check
          %p945 = pneg %p287
        $region86: #{tpu_custom_call.1} parent=83 // pred_check_branch
          %947 = sbr.rel (%p945) target = $region88
        $region87: #{tpu_custom_call.1} parent=83 // pred_region
          %s948 = sand.u32 %s272, 1
          %s949 = scalar_lea.sflag [#allocation4], %s948
          %s950 = sand.u32 %s272, 1
          %s951 = smul.addr %s950, 16
          %s952 = scalar_lea.vmem [#allocation8], %s951
          %953 = dma.done %s949, 256
        $region88: #{tpu_custom_call.1} parent=83 // pred_fallthru
          _
      $region84: #{tpu_custom_call.1} parent=5 // pred_fallthru
        _
    $region6: #{tpu_custom_call.1} parent=1 // loop_footer
      %s26 = sadd.s32 1, %s22
    $region7: #{tpu_custom_call.1} parent=1 // loop_footer_branch
      %21 = sbr.rel target = $region3
    $region8: #{tpu_custom_call.1} parent=1 // loop_exit
      _
    %954 = vsyncpa [#allocation3], 1
    %s955 = scalar_lea.sflag [#allocation3], 1
    %956 = vsyncpa %s955, 1
    %957 = vsyncpa [#allocation6], 1
    %958 = vsyncpa [#allocation4], 1
    %s959 = scalar_lea.sflag [#allocation4], 1
    %960 = vsyncpa %s959, 1

</llo_original>
